<compile_context>
chip_gen: v7x
topology: tpu7x:2x2x1
jax: 0.10.0
libtpu: 0.0.40
codegen_flags: <defaults>
</compile_context>

<pallas_src>
import functools

import jax
import jax.numpy as jnp
from jax import lax
from jax.experimental import pallas as pl
from jax.experimental.pallas import tpu as pltpu


def _lstm_ae_kernel(x_ref, wih_ref, whh_ref, b_ref, wlin_ref, blin_ref, y_ref,
                    *, seq_len, batch, hidden_dim):
    """Single invocation: hoisted input projection + unrolled LSTM recurrence + decode."""
    T, B, H = seq_len, batch, hidden_dim

    # ---- Hoisted input projection: one well-shaped (T*B, D) x (D, 4H) matmul,
    # bias folded in, entirely off the recurrence's serial chain.
    gates_x = (jnp.dot(x_ref[...], wih_ref[...],
                       preferred_element_type=jnp.float32)
               + b_ref[...])                                    # (T*B, 4H)

    whh = whh_ref[...]                                          # (H, 4H), loaded once

    h = jnp.zeros((B, H), jnp.float32)
    c = jnp.zeros((B, H), jnp.float32)

    # ---- Recurrence, fully unrolled (static T, tiny state). A static Python
    # unroll is equivalent to lax.fori_loop(..., unroll=True) here and keeps
    # every gates_x row slice static (row block t is timestep t's (B, 4H) slab).
    for t in range(T):
        gates = gates_x[t * B:(t + 1) * B, :] + jnp.dot(
            h, whh, preferred_element_type=jnp.float32)         # (B, 4H)
        # PyTorch gate order [i, f, g, o]. (At H=32 the sub-128-lane slices are
        # cheap VPU filler; keep H a multiple of 128 when scaling.)
        i_g = jax.nn.sigmoid(gates[:, 0 * H:1 * H])
        f_g = jax.nn.sigmoid(gates[:, 1 * H:2 * H])
        g_g = jnp.tanh(gates[:, 2 * H:3 * H])
        o_g = jax.nn.sigmoid(gates[:, 3 * H:4 * H])
        c = f_g * c + i_g * g_g
        h = o_g * jnp.tanh(c)

    # ---- Decode final hidden state once; the wrapper broadcasts it over T
    # (hidden.repeat(T,1,1).permute(1,0,2) feeds the same h_T to every step).
    y_ref[...] = (jnp.dot(h, wlin_ref[...], preferred_element_type=jnp.float32)
                  + blin_ref[...]).astype(y_ref.dtype)


def lstm_autoencoder_forward(x, params):
    """x: (B, T, D) float32 (batch_first, like the PyTorch module). Returns (B, T, D)."""
    B, T, D = x.shape
    H = params["w_hh_t"].shape[0]

    # Time-major flatten (pure XLA layout glue): rows [t*B, (t+1)*B) of x2d are
    # timestep t's (B, D) slab -> lets the kernel run ONE input-projection matmul.
    x2d = jnp.transpose(x, (1, 0, 2)).reshape(T * B, D)

    kernel = functools.partial(_lstm_ae_kernel, seq_len=T, batch=B, hidden_dim=H)

    y = pl.pallas_call(
        kernel,
        out_shape=jax.ShapeDtypeStruct((B, D), jnp.float32),
        # No grid: everything (a few KiB) lives in VMEM for the whole call and
        # the constant weights are single-buffered (no pipeline double-buffer).
        # At large B, add a batch-block "parallel" grid axis (shards the
        # recurrence across v7x's two TensorCores); at large H, store weights
        # in bf16 and set vmem_limit_bytes against v7x's 64 MiB VMEM.
        in_specs=[pl.BlockSpec(memory_space=pltpu.MemorySpace.VMEM)] * 6,
        out_specs=pl.BlockSpec(memory_space=pltpu.MemorySpace.VMEM),
    )(x2d, params["w_ih_t"], params["w_hh_t"], params["bias"],
      params["w_lin_t"], params["b_lin"])

    # hidden.repeat(T,1,1).permute(1,0,2) -> every timestep gets the same h_T;
    # broadcasting the decoded vector over T is pure glue.
    return jnp.broadcast_to(y[:, None, :], (B, T, D))


def init_params(key, input_dim, hidden_dim):
    """Deterministic init with the shapes of nn.LSTM(D,H,1) + nn.Linear(H,D)."""
    ks = jax.random.split(key, 6)
    s = 1.0 / jnp.sqrt(hidden_dim)
    w_ih = jax.random.uniform(ks[0], (4 * hidden_dim, input_dim), jnp.float32, -s, s)
    w_hh = jax.random.uniform(ks[1], (4 * hidden_dim, hidden_dim), jnp.float32, -s, s)
    b_ih = jax.random.uniform(ks[2], (4 * hidden_dim,), jnp.float32, -s, s)
    b_hh = jax.random.uniform(ks[3], (4 * hidden_dim,), jnp.float32, -s, s)
    w_lin = jax.random.uniform(ks[4], (input_dim, hidden_dim), jnp.float32, -s, s)
    b_lin = jax.random.uniform(ks[5], (input_dim,), jnp.float32, -s, s)
    return {
        "w_ih_t": w_ih.T,                              # (D, 4H)
        "w_hh_t": w_hh.T,                              # (H, 4H)
        "bias": (b_ih + b_hh)[None, :],                # (1, 4H)
        "w_lin_t": w_lin.T,                            # (H, D)
        "b_lin": b_lin[None, :],                       # (1, D)
    }


def reference_forward(x, params):
    """Pure-JAX reference (lax.scan LSTM) for correctness checking."""
    B, T, D = x.shape
    H = params["w_hh_t"].shape[0]

    def step(carry, x_t):
        h, c = carry
        gates = x_t @ params["w_ih_t"] + h @ params["w_hh_t"] + params["bias"]
        i = jax.nn.sigmoid(gates[:, 0 * H:1 * H])
        f = jax.nn.sigmoid(gates[:, 1 * H:2 * H])
        g = jnp.tanh(gates[:, 2 * H:3 * H])
        o = jax.nn.sigmoid(gates[:, 3 * H:4 * H])
        c = f * c + i * g
        h = o * jnp.tanh(c)
        return (h, c), None

    init = (jnp.zeros((B, H), jnp.float32), jnp.zeros((B, H), jnp.float32))
    (h_T, _), _ = lax.scan(step, init, jnp.transpose(x, (1, 0, 2)))
    y = h_T @ params["w_lin_t"] + params["b_lin"]
    return jnp.broadcast_to(y[:, None, :], (B, T, D))


if __name__ == "__main__":
    B, T, D, H = 4, 8, 16, 32   # batch, seq_len, input_dim, hidden_dim

    key = jax.random.PRNGKey(0)
    kx, kp = jax.random.split(key)
    x = jax.random.normal(kx, (B, T, D), jnp.float32)
    params = init_params(kp, D, H)

    out = lstm_autoencoder_forward(x, params)
    out = jax.block_until_ready(out)

    ref = reference_forward(x, params)
    assert out.shape == (B, T, D)
    assert jnp.allclose(out, ref, atol=1e-5, rtol=1e-5), "mismatch vs reference"

    print("KERNEL_OK")
</pallas_src>

<mosaic_0001>
module attributes {stable_mosaic.version = 11 : i64} {
  func.func @_lstm_ae_kernel(%arg0: memref<32x16xf32, #tpu.memory_space<vmem>>, %arg1: memref<16x128xf32, #tpu.memory_space<vmem>>, %arg2: memref<32x128xf32, #tpu.memory_space<vmem>>, %arg3: memref<1x128xf32, #tpu.memory_space<vmem>>, %arg4: memref<32x16xf32, #tpu.memory_space<vmem>>, %arg5: memref<1x16xf32, #tpu.memory_space<vmem>>, %arg6: memref<4x16xf32, #tpu.memory_space<vmem>>) attributes {dimension_semantics = [], scalar_prefetch = 0 : i64, scratch_operands = 0 : i64, tpu.core_type = #tpu.core_type<tc>} {
    %c0 = arith.constant 0 : index
    %c0_0 = arith.constant 0 : index
    %0 = vector.load %arg0[%c0, %c0_0] : memref<32x16xf32, #tpu.memory_space<vmem>>, vector<32x16xf32>
    %c0_1 = arith.constant 0 : index
    %c0_2 = arith.constant 0 : index
    %1 = vector.load %arg1[%c0_1, %c0_2] : memref<16x128xf32, #tpu.memory_space<vmem>>, vector<16x128xf32>
    %cst = arith.constant dense<0.000000e+00> : vector<32x128xf32>
    %2 = tpu.matmul %0, %1, %cst {dimension_numbers = #tpu.dot_dimension_numbers<[1], [0], [0], [1], [0, 0, 1, 1], [], []>} : vector<32x16xf32>, vector<16x128xf32>, vector<32x128xf32> -> vector<32x128xf32>
    %c0_3 = arith.constant 0 : index
    %c0_4 = arith.constant 0 : index
    %3 = vector.load %arg3[%c0_3, %c0_4] : memref<1x128xf32, #tpu.memory_space<vmem>>, vector<1x128xf32>
    %4 = vector.broadcast %3 : vector<1x128xf32> to vector<32x128xf32>
    %5 = arith.addf %2, %4 : vector<32x128xf32>
    %c0_5 = arith.constant 0 : index
    %c0_6 = arith.constant 0 : index
    %6 = vector.load %arg2[%c0_5, %c0_6] : memref<32x128xf32, #tpu.memory_space<vmem>>, vector<32x128xf32>
    %cst_7 = arith.constant 0.000000e+00 : f32
    %7 = vector.broadcast %cst_7 : f32 to vector<4x32xf32>
    %cst_8 = arith.constant 0.000000e+00 : f32
    %8 = vector.broadcast %cst_8 : f32 to vector<4x32xf32>
    %9 = vector.extract_strided_slice %5 {offsets = [0, 0], sizes = [4, 128], strides = [1, 1]} : vector<32x128xf32> to vector<4x128xf32>
    %cst_9 = arith.constant dense<0.000000e+00> : vector<4x128xf32>
    %10 = tpu.matmul %7, %6, %cst_9 {dimension_numbers = #tpu.dot_dimension_numbers<[1], [0], [0], [1], [0, 0, 1, 1], [], []>} : vector<4x32xf32>, vector<32x128xf32>, vector<4x128xf32> -> vector<4x128xf32>
    %11 = arith.addf %9, %10 : vector<4x128xf32>
    %12 = vector.extract_strided_slice %11 {offsets = [0, 0], sizes = [4, 32], strides = [1, 1]} : vector<4x128xf32> to vector<4x32xf32>
    %13 = arith.negf %12 : vector<4x32xf32>
    %14 = math.exp %13 : vector<4x32xf32>
    %cst_10 = arith.constant 1.000000e+00 : f32
    %15 = vector.broadcast %cst_10 : f32 to vector<4x32xf32>
    %16 = arith.addf %15, %14 : vector<4x32xf32>
    %17 = arith.divf %15, %16 : vector<4x32xf32>
    %18 = vector.extract_strided_slice %11 {offsets = [0, 32], sizes = [4, 32], strides = [1, 1]} : vector<4x128xf32> to vector<4x32xf32>
    %19 = arith.negf %18 : vector<4x32xf32>
    %20 = math.exp %19 : vector<4x32xf32>
    %cst_11 = arith.constant 1.000000e+00 : f32
    %21 = vector.broadcast %cst_11 : f32 to vector<4x32xf32>
    %22 = arith.addf %21, %20 : vector<4x32xf32>
    %23 = arith.divf %21, %22 : vector<4x32xf32>
    %24 = vector.extract_strided_slice %11 {offsets = [0, 64], sizes = [4, 32], strides = [1, 1]} : vector<4x128xf32> to vector<4x32xf32>
    %25 = math.tanh %24 : vector<4x32xf32>
    %26 = vector.extract_strided_slice %11 {offsets = [0, 96], sizes = [4, 32], strides = [1, 1]} : vector<4x128xf32> to vector<4x32xf32>
    %27 = arith.negf %26 : vector<4x32xf32>
    %28 = math.exp %27 : vector<4x32xf32>
    %cst_12 = arith.constant 1.000000e+00 : f32
    %29 = vector.broadcast %cst_12 : f32 to vector<4x32xf32>
    %30 = arith.addf %29, %28 : vector<4x32xf32>
    %31 = arith.divf %29, %30 : vector<4x32xf32>
    %32 = arith.mulf %23, %8 : vector<4x32xf32>
    %33 = arith.mulf %17, %25 : vector<4x32xf32>
    %34 = arith.addf %32, %33 : vector<4x32xf32>
    %35 = math.tanh %34 : vector<4x32xf32>
    %36 = arith.mulf %31, %35 : vector<4x32xf32>
    %37 = vector.extract_strided_slice %5 {offsets = [4, 0], sizes = [4, 128], strides = [1, 1]} : vector<32x128xf32> to vector<4x128xf32>
    %cst_13 = arith.constant dense<0.000000e+00> : vector<4x128xf32>
    %38 = tpu.matmul %36, %6, %cst_13 {dimension_numbers = #tpu.dot_dimension_numbers<[1], [0], [0], [1], [0, 0, 1, 1], [], []>} : vector<4x32xf32>, vector<32x128xf32>, vector<4x128xf32> -> vector<4x128xf32>
    %39 = arith.addf %37, %38 : vector<4x128xf32>
    %40 = vector.extract_strided_slice %39 {offsets = [0, 0], sizes = [4, 32], strides = [1, 1]} : vector<4x128xf32> to vector<4x32xf32>
    %41 = arith.negf %40 : vector<4x32xf32>
    %42 = math.exp %41 : vector<4x32xf32>
    %cst_14 = arith.constant 1.000000e+00 : f32
    %43 = vector.broadcast %cst_14 : f32 to vector<4x32xf32>
    %44 = arith.addf %43, %42 : vector<4x32xf32>
    %45 = arith.divf %43, %44 : vector<4x32xf32>
    %46 = vector.extract_strided_slice %39 {offsets = [0, 32], sizes = [4, 32], strides = [1, 1]} : vector<4x128xf32> to vector<4x32xf32>
    %47 = arith.negf %46 : vector<4x32xf32>
    %48 = math.exp %47 : vector<4x32xf32>
    %cst_15 = arith.constant 1.000000e+00 : f32
    %49 = vector.broadcast %cst_15 : f32 to vector<4x32xf32>
    %50 = arith.addf %49, %48 : vector<4x32xf32>
    %51 = arith.divf %49, %50 : vector<4x32xf32>
    %52 = vector.extract_strided_slice %39 {offsets = [0, 64], sizes = [4, 32], strides = [1, 1]} : vector<4x128xf32> to vector<4x32xf32>
    %53 = math.tanh %52 : vector<4x32xf32>
    %54 = vector.extract_strided_slice %39 {offsets = [0, 96], sizes = [4, 32], strides = [1, 1]} : vector<4x128xf32> to vector<4x32xf32>
    %55 = arith.negf %54 : vector<4x32xf32>
    %56 = math.exp %55 : vector<4x32xf32>
    %cst_16 = arith.constant 1.000000e+00 : f32
    %57 = vector.broadcast %cst_16 : f32 to vector<4x32xf32>
    %58 = arith.addf %57, %56 : vector<4x32xf32>
    %59 = arith.divf %57, %58 : vector<4x32xf32>
    %60 = arith.mulf %51, %34 : vector<4x32xf32>
    %61 = arith.mulf %45, %53 : vector<4x32xf32>
    %62 = arith.addf %60, %61 : vector<4x32xf32>
    %63 = math.tanh %62 : vector<4x32xf32>
    %64 = arith.mulf %59, %63 : vector<4x32xf32>
    %65 = vector.extract_strided_slice %5 {offsets = [8, 0], sizes = [4, 128], strides = [1, 1]} : vector<32x128xf32> to vector<4x128xf32>
    %cst_17 = arith.constant dense<0.000000e+00> : vector<4x128xf32>
    %66 = tpu.matmul %64, %6, %cst_17 {dimension_numbers = #tpu.dot_dimension_numbers<[1], [0], [0], [1], [0, 0, 1, 1], [], []>} : vector<4x32xf32>, vector<32x128xf32>, vector<4x128xf32> -> vector<4x128xf32>
    %67 = arith.addf %65, %66 : vector<4x128xf32>
    %68 = vector.extract_strided_slice %67 {offsets = [0, 0], sizes = [4, 32], strides = [1, 1]} : vector<4x128xf32> to vector<4x32xf32>
    %69 = arith.negf %68 : vector<4x32xf32>
    %70 = math.exp %69 : vector<4x32xf32>
    %cst_18 = arith.constant 1.000000e+00 : f32
    %71 = vector.broadcast %cst_18 : f32 to vector<4x32xf32>
    %72 = arith.addf %71, %70 : vector<4x32xf32>
    %73 = arith.divf %71, %72 : vector<4x32xf32>
    %74 = vector.extract_strided_slice %67 {offsets = [0, 32], sizes = [4, 32], strides = [1, 1]} : vector<4x128xf32> to vector<4x32xf32>
    %75 = arith.negf %74 : vector<4x32xf32>
    %76 = math.exp %75 : vector<4x32xf32>
    %cst_19 = arith.constant 1.000000e+00 : f32
    %77 = vector.broadcast %cst_19 : f32 to vector<4x32xf32>
    %78 = arith.addf %77, %76 : vector<4x32xf32>
    %79 = arith.divf %77, %78 : vector<4x32xf32>
    %80 = vector.extract_strided_slice %67 {offsets = [0, 64], sizes = [4, 32], strides = [1, 1]} : vector<4x128xf32> to vector<4x32xf32>
    %81 = math.tanh %80 : vector<4x32xf32>
    %82 = vector.extract_strided_slice %67 {offsets = [0, 96], sizes = [4, 32], strides = [1, 1]} : vector<4x128xf32> to vector<4x32xf32>
    %83 = arith.negf %82 : vector<4x32xf32>
    %84 = math.exp %83 : vector<4x32xf32>
    %cst_20 = arith.constant 1.000000e+00 : f32
    %85 = vector.broadcast %cst_20 : f32 to vector<4x32xf32>
    %86 = arith.addf %85, %84 : vector<4x32xf32>
    %87 = arith.divf %85, %86 : vector<4x32xf32>
    %88 = arith.mulf %79, %62 : vector<4x32xf32>
    %89 = arith.mulf %73, %81 : vector<4x32xf32>
    %90 = arith.addf %88, %89 : vector<4x32xf32>
    %91 = math.tanh %90 : vector<4x32xf32>
    %92 = arith.mulf %87, %91 : vector<4x32xf32>
    %93 = vector.extract_strided_slice %5 {offsets = [12, 0], sizes = [4, 128], strides = [1, 1]} : vector<32x128xf32> to vector<4x128xf32>
    %cst_21 = arith.constant dense<0.000000e+00> : vector<4x128xf32>
    %94 = tpu.matmul %92, %6, %cst_21 {dimension_numbers = #tpu.dot_dimension_numbers<[1], [0], [0], [1], [0, 0, 1, 1], [], []>} : vector<4x32xf32>, vector<32x128xf32>, vector<4x128xf32> -> vector<4x128xf32>
    %95 = arith.addf %93, %94 : vector<4x128xf32>
    %96 = vector.extract_strided_slice %95 {offsets = [0, 0], sizes = [4, 32], strides = [1, 1]} : vector<4x128xf32> to vector<4x32xf32>
    %97 = arith.negf %96 : vector<4x32xf32>
    %98 = math.exp %97 : vector<4x32xf32>
    %cst_22 = arith.constant 1.000000e+00 : f32
    %99 = vector.broadcast %cst_22 : f32 to vector<4x32xf32>
    %100 = arith.addf %99, %98 : vector<4x32xf32>
    %101 = arith.divf %99, %100 : vector<4x32xf32>
    %102 = vector.extract_strided_slice %95 {offsets = [0, 32], sizes = [4, 32], strides = [1, 1]} : vector<4x128xf32> to vector<4x32xf32>
    %103 = arith.negf %102 : vector<4x32xf32>
    %104 = math.exp %103 : vector<4x32xf32>
    %cst_23 = arith.constant 1.000000e+00 : f32
    %105 = vector.broadcast %cst_23 : f32 to vector<4x32xf32>
    %106 = arith.addf %105, %104 : vector<4x32xf32>
    %107 = arith.divf %105, %106 : vector<4x32xf32>
    %108 = vector.extract_strided_slice %95 {offsets = [0, 64], sizes = [4, 32], strides = [1, 1]} : vector<4x128xf32> to vector<4x32xf32>
    %109 = math.tanh %108 : vector<4x32xf32>
    %110 = vector.extract_strided_slice %95 {offsets = [0, 96], sizes = [4, 32], strides = [1, 1]} : vector<4x128xf32> to vector<4x32xf32>
    %111 = arith.negf %110 : vector<4x32xf32>
    %112 = math.exp %111 : vector<4x32xf32>
    %cst_24 = arith.constant 1.000000e+00 : f32
    %113 = vector.broadcast %cst_24 : f32 to vector<4x32xf32>
    %114 = arith.addf %113, %112 : vector<4x32xf32>
    %115 = arith.divf %113, %114 : vector<4x32xf32>
    %116 = arith.mulf %107, %90 : vector<4x32xf32>
    %117 = arith.mulf %101, %109 : vector<4x32xf32>
    %118 = arith.addf %116, %117 : vector<4x32xf32>
    %119 = math.tanh %118 : vector<4x32xf32>
    %120 = arith.mulf %115, %119 : vector<4x32xf32>
    %121 = vector.extract_strided_slice %5 {offsets = [16, 0], sizes = [4, 128], strides = [1, 1]} : vector<32x128xf32> to vector<4x128xf32>
    %cst_25 = arith.constant dense<0.000000e+00> : vector<4x128xf32>
    %122 = tpu.matmul %120, %6, %cst_25 {dimension_numbers = #tpu.dot_dimension_numbers<[1], [0], [0], [1], [0, 0, 1, 1], [], []>} : vector<4x32xf32>, vector<32x128xf32>, vector<4x128xf32> -> vector<4x128xf32>
    %123 = arith.addf %121, %122 : vector<4x128xf32>
    %124 = vector.extract_strided_slice %123 {offsets = [0, 0], sizes = [4, 32], strides = [1, 1]} : vector<4x128xf32> to vector<4x32xf32>
    %125 = arith.negf %124 : vector<4x32xf32>
    %126 = math.exp %125 : vector<4x32xf32>
    %cst_26 = arith.constant 1.000000e+00 : f32
    %127 = vector.broadcast %cst_26 : f32 to vector<4x32xf32>
    %128 = arith.addf %127, %126 : vector<4x32xf32>
    %129 = arith.divf %127, %128 : vector<4x32xf32>
    %130 = vector.extract_strided_slice %123 {offsets = [0, 32], sizes = [4, 32], strides = [1, 1]} : vector<4x128xf32> to vector<4x32xf32>
    %131 = arith.negf %130 : vector<4x32xf32>
    %132 = math.exp %131 : vector<4x32xf32>
    %cst_27 = arith.constant 1.000000e+00 : f32
    %133 = vector.broadcast %cst_27 : f32 to vector<4x32xf32>
    %134 = arith.addf %133, %132 : vector<4x32xf32>
    %135 = arith.divf %133, %134 : vector<4x32xf32>
    %136 = vector.extract_strided_slice %123 {offsets = [0, 64], sizes = [4, 32], strides = [1, 1]} : vector<4x128xf32> to vector<4x32xf32>
    %137 = math.tanh %136 : vector<4x32xf32>
    %138 = vector.extract_strided_slice %123 {offsets = [0, 96], sizes = [4, 32], strides = [1, 1]} : vector<4x128xf32> to vector<4x32xf32>
    %139 = arith.negf %138 : vector<4x32xf32>
    %140 = math.exp %139 : vector<4x32xf32>
    %cst_28 = arith.constant 1.000000e+00 : f32
    %141 = vector.broadcast %cst_28 : f32 to vector<4x32xf32>
    %142 = arith.addf %141, %140 : vector<4x32xf32>
    %143 = arith.divf %141, %142 : vector<4x32xf32>
    %144 = arith.mulf %135, %118 : vector<4x32xf32>
    %145 = arith.mulf %129, %137 : vector<4x32xf32>
    %146 = arith.addf %144, %145 : vector<4x32xf32>
    %147 = math.tanh %146 : vector<4x32xf32>
    %148 = arith.mulf %143, %147 : vector<4x32xf32>
    %149 = vector.extract_strided_slice %5 {offsets = [20, 0], sizes = [4, 128], strides = [1, 1]} : vector<32x128xf32> to vector<4x128xf32>
    %cst_29 = arith.constant dense<0.000000e+00> : vector<4x128xf32>
    %150 = tpu.matmul %148, %6, %cst_29 {dimension_numbers = #tpu.dot_dimension_numbers<[1], [0], [0], [1], [0, 0, 1, 1], [], []>} : vector<4x32xf32>, vector<32x128xf32>, vector<4x128xf32> -> vector<4x128xf32>
    %151 = arith.addf %149, %150 : vector<4x128xf32>
    %152 = vector.extract_strided_slice %151 {offsets = [0, 0], sizes = [4, 32], strides = [1, 1]} : vector<4x128xf32> to vector<4x32xf32>
    %153 = arith.negf %152 : vector<4x32xf32>
    %154 = math.exp %153 : vector<4x32xf32>
    %cst_30 = arith.constant 1.000000e+00 : f32
    %155 = vector.broadcast %cst_30 : f32 to vector<4x32xf32>
    %156 = arith.addf %155, %154 : vector<4x32xf32>
    %157 = arith.divf %155, %156 : vector<4x32xf32>
    %158 = vector.extract_strided_slice %151 {offsets = [0, 32], sizes = [4, 32], strides = [1, 1]} : vector<4x128xf32> to vector<4x32xf32>
    %159 = arith.negf %158 : vector<4x32xf32>
    %160 = math.exp %159 : vector<4x32xf32>
    %cst_31 = arith.constant 1.000000e+00 : f32
    %161 = vector.broadcast %cst_31 : f32 to vector<4x32xf32>
    %162 = arith.addf %161, %160 : vector<4x32xf32>
    %163 = arith.divf %161, %162 : vector<4x32xf32>
    %164 = vector.extract_strided_slice %151 {offsets = [0, 64], sizes = [4, 32], strides = [1, 1]} : vector<4x128xf32> to vector<4x32xf32>
    %165 = math.tanh %164 : vector<4x32xf32>
    %166 = vector.extract_strided_slice %151 {offsets = [0, 96], sizes = [4, 32], strides = [1, 1]} : vector<4x128xf32> to vector<4x32xf32>
    %167 = arith.negf %166 : vector<4x32xf32>
    %168 = math.exp %167 : vector<4x32xf32>
    %cst_32 = arith.constant 1.000000e+00 : f32
    %169 = vector.broadcast %cst_32 : f32 to vector<4x32xf32>
    %170 = arith.addf %169, %168 : vector<4x32xf32>
    %171 = arith.divf %169, %170 : vector<4x32xf32>
    %172 = arith.mulf %163, %146 : vector<4x32xf32>
    %173 = arith.mulf %157, %165 : vector<4x32xf32>
    %174 = arith.addf %172, %173 : vector<4x32xf32>
    %175 = math.tanh %174 : vector<4x32xf32>
    %176 = arith.mulf %171, %175 : vector<4x32xf32>
    %177 = vector.extract_strided_slice %5 {offsets = [24, 0], sizes = [4, 128], strides = [1, 1]} : vector<32x128xf32> to vector<4x128xf32>
    %cst_33 = arith.constant dense<0.000000e+00> : vector<4x128xf32>
    %178 = tpu.matmul %176, %6, %cst_33 {dimension_numbers = #tpu.dot_dimension_numbers<[1], [0], [0], [1], [0, 0, 1, 1], [], []>} : vector<4x32xf32>, vector<32x128xf32>, vector<4x128xf32> -> vector<4x128xf32>
    %179 = arith.addf %177, %178 : vector<4x128xf32>
    %180 = vector.extract_strided_slice %179 {offsets = [0, 0], sizes = [4, 32], strides = [1, 1]} : vector<4x128xf32> to vector<4x32xf32>
    %181 = arith.negf %180 : vector<4x32xf32>
    %182 = math.exp %181 : vector<4x32xf32>
    %cst_34 = arith.constant 1.000000e+00 : f32
    %183 = vector.broadcast %cst_34 : f32 to vector<4x32xf32>
    %184 = arith.addf %183, %182 : vector<4x32xf32>
    %185 = arith.divf %183, %184 : vector<4x32xf32>
    %186 = vector.extract_strided_slice %179 {offsets = [0, 32], sizes = [4, 32], strides = [1, 1]} : vector<4x128xf32> to vector<4x32xf32>
    %187 = arith.negf %186 : vector<4x32xf32>
    %188 = math.exp %187 : vector<4x32xf32>
    %cst_35 = arith.constant 1.000000e+00 : f32
    %189 = vector.broadcast %cst_35 : f32 to vector<4x32xf32>
    %190 = arith.addf %189, %188 : vector<4x32xf32>
    %191 = arith.divf %189, %190 : vector<4x32xf32>
    %192 = vector.extract_strided_slice %179 {offsets = [0, 64], sizes = [4, 32], strides = [1, 1]} : vector<4x128xf32> to vector<4x32xf32>
    %193 = math.tanh %192 : vector<4x32xf32>
    %194 = vector.extract_strided_slice %179 {offsets = [0, 96], sizes = [4, 32], strides = [1, 1]} : vector<4x128xf32> to vector<4x32xf32>
    %195 = arith.negf %194 : vector<4x32xf32>
    %196 = math.exp %195 : vector<4x32xf32>
    %cst_36 = arith.constant 1.000000e+00 : f32
    %197 = vector.broadcast %cst_36 : f32 to vector<4x32xf32>
    %198 = arith.addf %197, %196 : vector<4x32xf32>
    %199 = arith.divf %197, %198 : vector<4x32xf32>
    %200 = arith.mulf %191, %174 : vector<4x32xf32>
    %201 = arith.mulf %185, %193 : vector<4x32xf32>
    %202 = arith.addf %200, %201 : vector<4x32xf32>
    %203 = math.tanh %202 : vector<4x32xf32>
    %204 = arith.mulf %199, %203 : vector<4x32xf32>
    %205 = vector.extract_strided_slice %5 {offsets = [28, 0], sizes = [4, 128], strides = [1, 1]} : vector<32x128xf32> to vector<4x128xf32>
    %cst_37 = arith.constant dense<0.000000e+00> : vector<4x128xf32>
    %206 = tpu.matmul %204, %6, %cst_37 {dimension_numbers = #tpu.dot_dimension_numbers<[1], [0], [0], [1], [0, 0, 1, 1], [], []>} : vector<4x32xf32>, vector<32x128xf32>, vector<4x128xf32> -> vector<4x128xf32>
    %207 = arith.addf %205, %206 : vector<4x128xf32>
    %208 = vector.extract_strided_slice %207 {offsets = [0, 0], sizes = [4, 32], strides = [1, 1]} : vector<4x128xf32> to vector<4x32xf32>
    %209 = arith.negf %208 : vector<4x32xf32>
    %210 = math.exp %209 : vector<4x32xf32>
    %cst_38 = arith.constant 1.000000e+00 : f32
    %211 = vector.broadcast %cst_38 : f32 to vector<4x32xf32>
    %212 = arith.addf %211, %210 : vector<4x32xf32>
    %213 = arith.divf %211, %212 : vector<4x32xf32>
    %214 = vector.extract_strided_slice %207 {offsets = [0, 32], sizes = [4, 32], strides = [1, 1]} : vector<4x128xf32> to vector<4x32xf32>
    %215 = arith.negf %214 : vector<4x32xf32>
    %216 = math.exp %215 : vector<4x32xf32>
    %cst_39 = arith.constant 1.000000e+00 : f32
    %217 = vector.broadcast %cst_39 : f32 to vector<4x32xf32>
    %218 = arith.addf %217, %216 : vector<4x32xf32>
    %219 = arith.divf %217, %218 : vector<4x32xf32>
    %220 = vector.extract_strided_slice %207 {offsets = [0, 64], sizes = [4, 32], strides = [1, 1]} : vector<4x128xf32> to vector<4x32xf32>
    %221 = math.tanh %220 : vector<4x32xf32>
    %222 = vector.extract_strided_slice %207 {offsets = [0, 96], sizes = [4, 32], strides = [1, 1]} : vector<4x128xf32> to vector<4x32xf32>
    %223 = arith.negf %222 : vector<4x32xf32>
    %224 = math.exp %223 : vector<4x32xf32>
    %cst_40 = arith.constant 1.000000e+00 : f32
    %225 = vector.broadcast %cst_40 : f32 to vector<4x32xf32>
    %226 = arith.addf %225, %224 : vector<4x32xf32>
    %227 = arith.divf %225, %226 : vector<4x32xf32>
    %228 = arith.mulf %219, %202 : vector<4x32xf32>
    %229 = arith.mulf %213, %221 : vector<4x32xf32>
    %230 = arith.addf %228, %229 : vector<4x32xf32>
    %231 = math.tanh %230 : vector<4x32xf32>
    %232 = arith.mulf %227, %231 : vector<4x32xf32>
    %c0_41 = arith.constant 0 : index
    %c0_42 = arith.constant 0 : index
    %233 = vector.load %arg4[%c0_41, %c0_42] : memref<32x16xf32, #tpu.memory_space<vmem>>, vector<32x16xf32>
    %cst_43 = arith.constant dense<0.000000e+00> : vector<4x16xf32>
    %234 = tpu.matmul %232, %233, %cst_43 {dimension_numbers = #tpu.dot_dimension_numbers<[1], [0], [0], [1], [0, 0, 1, 1], [], []>} : vector<4x32xf32>, vector<32x16xf32>, vector<4x16xf32> -> vector<4x16xf32>
    %c0_44 = arith.constant 0 : index
    %c0_45 = arith.constant 0 : index
    %235 = vector.load %arg5[%c0_44, %c0_45] : memref<1x16xf32, #tpu.memory_space<vmem>>, vector<1x16xf32>
    %236 = vector.broadcast %235 : vector<1x16xf32> to vector<4x16xf32>
    %237 = arith.addf %234, %236 : vector<4x16xf32>
    %c0_46 = arith.constant 0 : index
    %c0_47 = arith.constant 0 : index
    %238 = vector.load %arg6[%c0_46, %c0_47] : memref<4x16xf32, #tpu.memory_space<vmem>>, vector<4x16xf32>
    tpu.vector_store %arg6[%c0_46, %c0_47], %237 {strides = array<i32>} : memref<4x16xf32, #tpu.memory_space<vmem>>, vector<4x16xf32>,
    return
  }
}

</mosaic_0001>

<llo_original>
// kernel: tpu_custom_call.1
$region0: #{tpu_custom_call.1}
  #allocation0 [shape = 'u32[]', space=smem, size = 0x4, offset = 0x4, fixed_abs, tag = 'smem constant byte address 0x4 - core index']
  #allocation1 [shape = 'u32[144,128]{1,0:T(1,128)}', space=vmem, size = 0x12000, scoped, tag = 'internal scratch']
  %s0 = inlined_call_operand.vmem [shape: f32[32,16], index: 0, kind: input, shape index: {}]
  %s1 = inlined_call_operand.vmem [shape: f32[16,128], index: 1, kind: input, shape index: {}]
  %s2 = inlined_call_operand.vmem [shape: f32[32,128], index: 2, kind: input, shape index: {}]
  %s3 = inlined_call_operand.vmem [shape: f32[1,128], index: 3, kind: input, shape index: {}]
  %s4 = inlined_call_operand.vmem [shape: f32[32,16], index: 4, kind: input, shape index: {}]
  %s5 = inlined_call_operand.vmem [shape: f32[1,16], index: 5, kind: input, shape index: {}]
  %s6 = inlined_call_operand.hbm [shape: f32[4,16], index: 6, kind: output, shape index: {}]
  %s7 = sld [smem:[#allocation0]]
  $region34: #{tpu_custom_call.1} parent=0
    _
  %s9 = ssub.s32 1, %s7
  %s10 = scalar_select 0, %s9, %s7
  $region1: #{tpu_custom_call.1} parent=0
    #allocation2 [shape = 'u8[2048]{0}', space=vmem, size = 0x800, scoped, tag = 'output window, operand 0, single buffered']
    #allocation3 [shape = 's32[1]{0}', space=sflag, size = 0x4, scoped, tag = 'scoped memory for tpu_custom_call.1']
    %11 = vsyncpa [#allocation3], 0
    // Predicated region
    $region2: #{tpu_custom_call.1} parent=1 // pred_check
      _
    $region3: #{tpu_custom_call.1} parent=1 // pred_check_branch
      %13 = sbr.rel (0) target = $region5
    $region4: #{tpu_custom_call.1} parent=1 // pred_region
      _
    $region5: #{tpu_custom_call.1} parent=1 // pred_fallthru
      _
    // Predicated region
    $region6: #{tpu_custom_call.1} parent=1 // pred_check
      _
    $region7: #{tpu_custom_call.1} parent=1 // pred_check_branch
      %15 = sbr.rel (0) target = $region9
    $region8: #{tpu_custom_call.1} parent=1 // pred_region
      _
    $region9: #{tpu_custom_call.1} parent=1 // pred_fallthru
      _
    // Predicated region
    $region10: #{tpu_custom_call.1} parent=1 // pred_check
      _
    $region11: #{tpu_custom_call.1} parent=1 // pred_check_branch
      %17 = sbr.rel (0) target = $region13
    $region12: #{tpu_custom_call.1} parent=1 // pred_region
      _
    $region13: #{tpu_custom_call.1} parent=1 // pred_fallthru
      _
    // Predicated region
    $region14: #{tpu_custom_call.1} parent=1 // pred_check
      _
    $region15: #{tpu_custom_call.1} parent=1 // pred_check_branch
      %19 = sbr.rel (0) target = $region17
    $region16: #{tpu_custom_call.1} parent=1 // pred_region
      _
    $region17: #{tpu_custom_call.1} parent=1 // pred_fallthru
      _
    // Predicated region
    $region18: #{tpu_custom_call.1} parent=1 // pred_check
      _
    $region19: #{tpu_custom_call.1} parent=1 // pred_check_branch
      %21 = sbr.rel (0) target = $region21
    $region20: #{tpu_custom_call.1} parent=1 // pred_region
      _
    $region21: #{tpu_custom_call.1} parent=1 // pred_fallthru
      _
    // Predicated region
    $region22: #{tpu_custom_call.1} parent=1 // pred_check
      _
    $region23: #{tpu_custom_call.1} parent=1 // pred_check_branch
      %23 = sbr.rel (0) target = $region25
    $region24: #{tpu_custom_call.1} parent=1 // pred_region
      _
    $region25: #{tpu_custom_call.1} parent=1 // pred_fallthru
      _
    %v24 = vld [vmem:[%s0] sm:$0xff]
    %v25 = vld [vmem:[%s0 + $0x8] sm:$0xff]
    %v26 = vld [vmem:[%s0 + $0x10] sm:$0xff]
    %v27 = vld [vmem:[%s0 + $0x18] sm:$0xff]
    %v28 = vld [vmem:[%s1] sm:$0xff]
    %v29 = vld [vmem:[%s1 + $0x8] sm:$0xff]
    %v30 = vld [vmem:[%s3] sm:$0x1]
    %v32 = vlaneseq
    %v33 = vshrl.u32 %v32, 7
    %v34 = vsub.s32 0, %v33
    %v35 = vrot.slane %v30, %v34
    %vm37 = vcmask 130048
    %v39 = vsel %vm37, %v24, 0
    %v42 = vsel %vm37, %v25, 0
    %v45 = vsel %vm37, %v26, 0
    %v48 = vsel %vm37, %v27, 0
    %50 = vmatprep.subr.mxu0 0.0
    %51 = vmatpush1.msra.mxu0 %v28
    %52 = vmatprep.subr.mxu0 0.0
    %53 = vmatpush1.msra.mxu0 %v29
    %54 = vmatprep.subr.mxu0 0.0
    %55 = vmatpush1.msra.mxu0 0.0
    %56 = vmatprep.subr.mxu0 0.0
    %57 = vmatpush1.msra.mxu0 0.0
    %58 = vmatprep.subr.mxu0 0.0
    %59 = vmatpush1.msra.mxu0 0.0
    %60 = vmatprep.subr.mxu0 0.0
    %61 = vmatpush1.msra.mxu0 0.0
    %62 = vmatprep.subr.mxu0 0.0
    %63 = vmatpush1.msra.mxu0 0.0
    %64 = vmatprep.subr.mxu0 0.0
    %65 = vmatpush1.msra.mxu0 0.0
    %66 = vmatprep.subr.mxu0 0.0
    %67 = vmatpush1.msra.mxu0 0.0
    %68 = vmatprep.subr.mxu0 0.0
    %69 = vmatpush1.msra.mxu0 0.0
    %70 = vmatprep.subr.mxu0 0.0
    %71 = vmatpush1.msra.mxu0 0.0
    %72 = vmatprep.subr.mxu0 0.0
    %73 = vmatpush1.msra.mxu0 0.0
    %74 = vmatprep.subr.mxu0 0.0
    %75 = vmatpush1.msra.mxu0 0.0
    %76 = vmatprep.subr.mxu0 0.0
    %77 = vmatpush1.msra.mxu0 0.0
    %78 = vmatprep.subr.mxu0 0.0
    %79 = vmatpush1.msra.mxu0 0.0
    %80 = vmatprep.subr.mxu0 0.0
    %81 = vmatpush1.msra.mxu0 0.0
    %82 = vmatprep.subr.mxu0 0.0
    %83 = vmatpush1.msra.mxu0 0.0
    %84 = vmatprep.subr.mxu0 0.0
    %85 = vmatpush1.msra.mxu0 0.0
    %86 = vmatprep.subr.mxu0 0.0
    %87 = vmatpush1.msra.mxu0 0.0
    %88 = vmatprep.subr.mxu0 0.0
    %89 = vmatpush1.msra.mxu0 0.0
    %90 = vmatprep.subr.mxu0 0.0
    %91 = vmatpush1.msra.mxu0 0.0
    %92 = vmatprep.subr.mxu0 0.0
    %93 = vmatpush1.msra.mxu0 0.0
    %94 = vmatprep.subr.mxu0 0.0
    %95 = vmatpush1.msra.mxu0 0.0
    %96 = vmatprep.subr.mxu0 0.0
    %97 = vmatpush1.msra.mxu0 0.0
    %98 = vmatprep.subr.mxu0 0.0
    %99 = vmatpush1.msra.mxu0 0.0
    %100 = vmatprep.subr.mxu0 0.0
    %101 = vmatpush1.msra.mxu0 0.0
    %102 = vmatprep.subr.mxu0 0.0
    %103 = vmatpush1.msra.mxu0 0.0
    %104 = vmatprep.subr.mxu0 0.0
    %105 = vmatpush1.msra.mxu0 0.0
    %106 = vmatprep.subr.mxu0 0.0
    %107 = vmatpush1.msra.mxu0 0.0
    %108 = vmatprep.subr.mxu0 0.0
    %109 = vmatpush1.msra.mxu0 0.0
    %110 = vmatprep.subr.mxu0 0.0
    %111 = vmatpush1.msra.mxu0 0.0
    %112 = vmatprep.subr.mxu0 0.0
    %113 = vmatpush1.msra.mxu0 0.0
    %114 = vmatprep.mubr.f32.mxu0 0.0
    %115 = vmatmul.mubr.f32.gmra.mrb[0].mxu0 %v39
    %v116 = vpop.f32.mrb[0].mxu0
    %v117 = vadd.f32 %v35, %v116
    %v118 = vpop.f32.mrb[0].mxu0
    %119 = vmatprep.mubr.f32.mxu0 0.0
    %120 = vmatmul.mubr.f32.gmra.mrb[0].mxu0 %v42
    %v121 = vpop.f32.mrb[0].mxu0
    %v122 = vadd.f32 %v35, %v121
    %v123 = vpop.f32.mrb[0].mxu0
    %124 = vmatprep.mubr.f32.mxu0 0.0
    %125 = vmatmul.mubr.f32.gmra.mrb[0].mxu0 %v45
    %v126 = vpop.f32.mrb[0].mxu0
    %v127 = vadd.f32 %v35, %v126
    %v128 = vpop.f32.mrb[0].mxu0
    %129 = vmatprep.mubr.f32.mxu0 0.0
    %130 = vmatmul.mubr.f32.gmra.mrb[0].mxu0 %v48
    %v131 = vpop.f32.mrb[0].mxu0
    %v132 = vadd.f32 %v35, %v131
    %v133 = vpop.f32.mrb[0].mxu0
    %134 = vdwg.mxu0
    %v135 = vld [vmem:[%s2] sm:$0xff]
    %v136 = vld [vmem:[%s2 + $0x8] sm:$0xff]
    %v137 = vld [vmem:[%s2 + $0x10] sm:$0xff]
    %v138 = vld [vmem:[%s2 + $0x18] sm:$0xff]
    %vm139 = vcmask 261120
    %v141 = vsel %vm139, 0.0, 0
    %143 = vmatprep.subr.mxu0 0.0
    %144 = vmatpush1.msra.mxu0 %v135
    %145 = vmatprep.subr.mxu0 0.0
    %146 = vmatpush1.msra.mxu0 %v136
    %147 = vmatprep.subr.mxu0 0.0
    %148 = vmatpush1.msra.mxu0 %v137
    %149 = vmatprep.subr.mxu0 0.0
    %150 = vmatpush1.msra.mxu0 %v138
    %151 = vmatprep.subr.mxu0 0.0
    %152 = vmatpush1.msra.mxu0 0.0
    %153 = vmatprep.subr.mxu0 0.0
    %154 = vmatpush1.msra.mxu0 0.0
    %155 = vmatprep.subr.mxu0 0.0
    %156 = vmatpush1.msra.mxu0 0.0
    %157 = vmatprep.subr.mxu0 0.0
    %158 = vmatpush1.msra.mxu0 0.0
    %159 = vmatprep.subr.mxu0 0.0
    %160 = vmatpush1.msra.mxu0 0.0
    %161 = vmatprep.subr.mxu0 0.0
    %162 = vmatpush1.msra.mxu0 0.0
    %163 = vmatprep.subr.mxu0 0.0
    %164 = vmatpush1.msra.mxu0 0.0
    %165 = vmatprep.subr.mxu0 0.0
    %166 = vmatpush1.msra.mxu0 0.0
    %167 = vmatprep.subr.mxu0 0.0
    %168 = vmatpush1.msra.mxu0 0.0
    %169 = vmatprep.subr.mxu0 0.0
    %170 = vmatpush1.msra.mxu0 0.0
    %171 = vmatprep.subr.mxu0 0.0
    %172 = vmatpush1.msra.mxu0 0.0
    %173 = vmatprep.subr.mxu0 0.0
    %174 = vmatpush1.msra.mxu0 0.0
    %175 = vmatprep.subr.mxu0 0.0
    %176 = vmatpush1.msra.mxu0 0.0
    %177 = vmatprep.subr.mxu0 0.0
    %178 = vmatpush1.msra.mxu0 0.0
    %179 = vmatprep.subr.mxu0 0.0
    %180 = vmatpush1.msra.mxu0 0.0
    %181 = vmatprep.subr.mxu0 0.0
    %182 = vmatpush1.msra.mxu0 0.0
    %183 = vmatprep.subr.mxu0 0.0
    %184 = vmatpush1.msra.mxu0 0.0
    %185 = vmatprep.subr.mxu0 0.0
    %186 = vmatpush1.msra.mxu0 0.0
    %187 = vmatprep.subr.mxu0 0.0
    %188 = vmatpush1.msra.mxu0 0.0
    %189 = vmatprep.subr.mxu0 0.0
    %190 = vmatpush1.msra.mxu0 0.0
    %191 = vmatprep.subr.mxu0 0.0
    %192 = vmatpush1.msra.mxu0 0.0
    %193 = vmatprep.subr.mxu0 0.0
    %194 = vmatpush1.msra.mxu0 0.0
    %195 = vmatprep.subr.mxu0 0.0
    %196 = vmatpush1.msra.mxu0 0.0
    %197 = vmatprep.subr.mxu0 0.0
    %198 = vmatpush1.msra.mxu0 0.0
    %199 = vmatprep.subr.mxu0 0.0
    %200 = vmatpush1.msra.mxu0 0.0
    %201 = vmatprep.subr.mxu0 0.0
    %202 = vmatpush1.msra.mxu0 0.0
    %203 = vmatprep.subr.mxu0 0.0
    %204 = vmatpush1.msra.mxu0 0.0
    %205 = vmatprep.subr.mxu0 0.0
    %206 = vmatpush1.msra.mxu0 0.0
    %207 = vmatprep.mubr.f32.mxu0 0.0
    %208 = vmatmul.mubr.f32.gmra.mrb[0].mxu0 %v141
    %v209 = vpop.f32.mrb[0].mxu0
    %v210 = vadd.f32 0.0, %v209
    %v211 = vpop.f32.mrb[0].mxu0
    %212 = vdwg.mxu0
    %v213 = vadd.f32 %v117, %v210
    %v214 = vxor.u32 %v213, 2147483648
    %v215 = vmul.f32 %v214, 1.442695
    %v216 = vpow.pop %v215
    %v217 = vadd.f32 %v216, 1.0
    %v218 = vrcp.pop %v217
    %v219 = vmul.f32 1.0, %v218
    %v220 = vtanh.pop %v213
    %v221 = vmul.f32 %v219, 0.0
    %223 = vrot.lane.b32.xlu0 %v220, 64
    %v224 = vpop.permute.xlu0 %223
    %v226 = vmul.f32 %v219, %v224
    %228 = vrot.lane.b32.xlu0 %v226, 32
    %v229 = vpop.permute.xlu0 %228
    %v231 = vadd.f32 %v221, %v229
    %v232 = vtanh.pop %v231
    %234 = vrot.lane.b32.xlu0 %v232, 64
    %v235 = vpop.permute.xlu0 %234
    %v237 = vmul.f32 %v219, %v235
    %239 = vrot.lane.b32.xlu0 %v237, 32
    %v240 = vpop.permute.xlu0 %239
    %v241 = vsel %vm139, %v240, 0
    %243 = vmatprep.subr.mxu0 0.0
    %244 = vmatpush1.msra.mxu0 %v135
    %245 = vmatprep.subr.mxu0 0.0
    %246 = vmatpush1.msra.mxu0 %v136
    %247 = vmatprep.subr.mxu0 0.0
    %248 = vmatpush1.msra.mxu0 %v137
    %249 = vmatprep.subr.mxu0 0.0
    %250 = vmatpush1.msra.mxu0 %v138
    %251 = vmatprep.subr.mxu0 0.0
    %252 = vmatpush1.msra.mxu0 0.0
    %253 = vmatprep.subr.mxu0 0.0
    %254 = vmatpush1.msra.mxu0 0.0
    %255 = vmatprep.subr.mxu0 0.0
    %256 = vmatpush1.msra.mxu0 0.0
    %257 = vmatprep.subr.mxu0 0.0
    %258 = vmatpush1.msra.mxu0 0.0
    %259 = vmatprep.subr.mxu0 0.0
    %260 = vmatpush1.msra.mxu0 0.0
    %261 = vmatprep.subr.mxu0 0.0
    %262 = vmatpush1.msra.mxu0 0.0
    %263 = vmatprep.subr.mxu0 0.0
    %264 = vmatpush1.msra.mxu0 0.0
    %265 = vmatprep.subr.mxu0 0.0
    %266 = vmatpush1.msra.mxu0 0.0
    %267 = vmatprep.subr.mxu0 0.0
    %268 = vmatpush1.msra.mxu0 0.0
    %269 = vmatprep.subr.mxu0 0.0
    %270 = vmatpush1.msra.mxu0 0.0
    %271 = vmatprep.subr.mxu0 0.0
    %272 = vmatpush1.msra.mxu0 0.0
    %273 = vmatprep.subr.mxu0 0.0
    %274 = vmatpush1.msra.mxu0 0.0
    %275 = vmatprep.subr.mxu0 0.0
    %276 = vmatpush1.msra.mxu0 0.0
    %277 = vmatprep.subr.mxu0 0.0
    %278 = vmatpush1.msra.mxu0 0.0
    %279 = vmatprep.subr.mxu0 0.0
    %280 = vmatpush1.msra.mxu0 0.0
    %281 = vmatprep.subr.mxu0 0.0
    %282 = vmatpush1.msra.mxu0 0.0
    %283 = vmatprep.subr.mxu0 0.0
    %284 = vmatpush1.msra.mxu0 0.0
    %285 = vmatprep.subr.mxu0 0.0
    %286 = vmatpush1.msra.mxu0 0.0
    %287 = vmatprep.subr.mxu0 0.0
    %288 = vmatpush1.msra.mxu0 0.0
    %289 = vmatprep.subr.mxu0 0.0
    %290 = vmatpush1.msra.mxu0 0.0
    %291 = vmatprep.subr.mxu0 0.0
    %292 = vmatpush1.msra.mxu0 0.0
    %293 = vmatprep.subr.mxu0 0.0
    %294 = vmatpush1.msra.mxu0 0.0
    %295 = vmatprep.subr.mxu0 0.0
    %296 = vmatpush1.msra.mxu0 0.0
    %297 = vmatprep.subr.mxu0 0.0
    %298 = vmatpush1.msra.mxu0 0.0
    %299 = vmatprep.subr.mxu0 0.0
    %300 = vmatpush1.msra.mxu0 0.0
    %301 = vmatprep.subr.mxu0 0.0
    %302 = vmatpush1.msra.mxu0 0.0
    %303 = vmatprep.subr.mxu0 0.0
    %304 = vmatpush1.msra.mxu0 0.0
    %305 = vmatprep.subr.mxu0 0.0
    %306 = vmatpush1.msra.mxu0 0.0
    %307 = vmatprep.mubr.f32.mxu0 0.0
    %308 = vmatmul.mubr.f32.gmra.mrb[0].mxu0 %v241
    %v309 = vpop.f32.mrb[0].mxu0
    %v310 = vadd.f32 0.0, %v309
    %v311 = vpop.f32.mrb[0].mxu0
    %312 = vdwg.mxu0
    %v314 = vrot.slane %v310, 4
    %v316 = vadd.f32 %v117, %v314
    %v317 = vxor.u32 %v316, 2147483648
    %v318 = vmul.f32 %v317, 1.442695
    %v319 = vpow.pop %v318
    %v320 = vadd.f32 %v319, 1.0
    %v321 = vrcp.pop %v320
    %v322 = vmul.f32 1.0, %v321
    %v323 = vtanh.pop %v316
    %v325 = vrot.slane %v231, 4
    %v327 = vmul.f32 %v322, %v325
    %329 = vrot.lane.b32.xlu0 %v323, 64
    %v330 = vpop.permute.xlu0 %329
    %v332 = vmul.f32 %v322, %v330
    %334 = vrot.lane.b32.xlu0 %v332, 32
    %v335 = vpop.permute.xlu0 %334
    %v337 = vadd.f32 %v327, %v335
    %v338 = vtanh.pop %v337
    %340 = vrot.lane.b32.xlu0 %v338, 64
    %v341 = vpop.permute.xlu0 %340
    %v343 = vmul.f32 %v322, %v341
    %v345 = vrot.slane %v343, 4
    %346 = vrot.lane.b32.xlu0 %v345, 32
    %v347 = vpop.permute.xlu0 %346
    %v348 = vsel %vm139, %v347, 0
    %350 = vmatprep.subr.mxu0 0.0
    %351 = vmatpush1.msra.mxu0 %v135
    %352 = vmatprep.subr.mxu0 0.0
    %353 = vmatpush1.msra.mxu0 %v136
    %354 = vmatprep.subr.mxu0 0.0
    %355 = vmatpush1.msra.mxu0 %v137
    %356 = vmatprep.subr.mxu0 0.0
    %357 = vmatpush1.msra.mxu0 %v138
    %358 = vmatprep.subr.mxu0 0.0
    %359 = vmatpush1.msra.mxu0 0.0
    %360 = vmatprep.subr.mxu0 0.0
    %361 = vmatpush1.msra.mxu0 0.0
    %362 = vmatprep.subr.mxu0 0.0
    %363 = vmatpush1.msra.mxu0 0.0
    %364 = vmatprep.subr.mxu0 0.0
    %365 = vmatpush1.msra.mxu0 0.0
    %366 = vmatprep.subr.mxu0 0.0
    %367 = vmatpush1.msra.mxu0 0.0
    %368 = vmatprep.subr.mxu0 0.0
    %369 = vmatpush1.msra.mxu0 0.0
    %370 = vmatprep.subr.mxu0 0.0
    %371 = vmatpush1.msra.mxu0 0.0
    %372 = vmatprep.subr.mxu0 0.0
    %373 = vmatpush1.msra.mxu0 0.0
    %374 = vmatprep.subr.mxu0 0.0
    %375 = vmatpush1.msra.mxu0 0.0
    %376 = vmatprep.subr.mxu0 0.0
    %377 = vmatpush1.msra.mxu0 0.0
    %378 = vmatprep.subr.mxu0 0.0
    %379 = vmatpush1.msra.mxu0 0.0
    %380 = vmatprep.subr.mxu0 0.0
    %381 = vmatpush1.msra.mxu0 0.0
    %382 = vmatprep.subr.mxu0 0.0
    %383 = vmatpush1.msra.mxu0 0.0
    %384 = vmatprep.subr.mxu0 0.0
    %385 = vmatpush1.msra.mxu0 0.0
    %386 = vmatprep.subr.mxu0 0.0
    %387 = vmatpush1.msra.mxu0 0.0
    %388 = vmatprep.subr.mxu0 0.0
    %389 = vmatpush1.msra.mxu0 0.0
    %390 = vmatprep.subr.mxu0 0.0
    %391 = vmatpush1.msra.mxu0 0.0
    %392 = vmatprep.subr.mxu0 0.0
    %393 = vmatpush1.msra.mxu0 0.0
    %394 = vmatprep.subr.mxu0 0.0
    %395 = vmatpush1.msra.mxu0 0.0
    %396 = vmatprep.subr.mxu0 0.0
    %397 = vmatpush1.msra.mxu0 0.0
    %398 = vmatprep.subr.mxu0 0.0
    %399 = vmatpush1.msra.mxu0 0.0
    %400 = vmatprep.subr.mxu0 0.0
    %401 = vmatpush1.msra.mxu0 0.0
    %402 = vmatprep.subr.mxu0 0.0
    %403 = vmatpush1.msra.mxu0 0.0
    %404 = vmatprep.subr.mxu0 0.0
    %405 = vmatpush1.msra.mxu0 0.0
    %406 = vmatprep.subr.mxu0 0.0
    %407 = vmatpush1.msra.mxu0 0.0
    %408 = vmatprep.subr.mxu0 0.0
    %409 = vmatpush1.msra.mxu0 0.0
    %410 = vmatprep.subr.mxu0 0.0
    %411 = vmatpush1.msra.mxu0 0.0
    %412 = vmatprep.subr.mxu0 0.0
    %413 = vmatpush1.msra.mxu0 0.0
    %414 = vmatprep.mubr.f32.mxu0 0.0
    %415 = vmatmul.mubr.f32.gmra.mrb[0].mxu0 %v348
    %v416 = vpop.f32.mrb[0].mxu0
    %v417 = vadd.f32 0.0, %v416
    %v418 = vpop.f32.mrb[0].mxu0
    %419 = vdwg.mxu0
    %v420 = vadd.f32 %v122, %v417
    %v421 = vxor.u32 %v420, 2147483648
    %v422 = vmul.f32 %v421, 1.442695
    %v423 = vpow.pop %v422
    %v424 = vadd.f32 %v423, 1.0
    %v425 = vrcp.pop %v424
    %v426 = vmul.f32 1.0, %v425
    %v427 = vtanh.pop %v420
    %v429 = vrot.slane %v337, 4
    %v431 = vmul.f32 %v426, %v429
    %433 = vrot.lane.b32.xlu0 %v427, 64
    %v434 = vpop.permute.xlu0 %433
    %v436 = vmul.f32 %v426, %v434
    %438 = vrot.lane.b32.xlu0 %v436, 32
    %v439 = vpop.permute.xlu0 %438
    %v441 = vadd.f32 %v431, %v439
    %v442 = vtanh.pop %v441
    %444 = vrot.lane.b32.xlu0 %v442, 64
    %v445 = vpop.permute.xlu0 %444
    %v447 = vmul.f32 %v426, %v445
    %449 = vrot.lane.b32.xlu0 %v447, 32
    %v450 = vpop.permute.xlu0 %449
    %v451 = vsel %vm139, %v450, 0
    %453 = vmatprep.subr.mxu0 0.0
    %454 = vmatpush1.msra.mxu0 %v135
    %455 = vmatprep.subr.mxu0 0.0
    %456 = vmatpush1.msra.mxu0 %v136
    %457 = vmatprep.subr.mxu0 0.0
    %458 = vmatpush1.msra.mxu0 %v137
    %459 = vmatprep.subr.mxu0 0.0
    %460 = vmatpush1.msra.mxu0 %v138
    %461 = vmatprep.subr.mxu0 0.0
    %462 = vmatpush1.msra.mxu0 0.0
    %463 = vmatprep.subr.mxu0 0.0
    %464 = vmatpush1.msra.mxu0 0.0
    %465 = vmatprep.subr.mxu0 0.0
    %466 = vmatpush1.msra.mxu0 0.0
    %467 = vmatprep.subr.mxu0 0.0
    %468 = vmatpush1.msra.mxu0 0.0
    %469 = vmatprep.subr.mxu0 0.0
    %470 = vmatpush1.msra.mxu0 0.0
    %471 = vmatprep.subr.mxu0 0.0
    %472 = vmatpush1.msra.mxu0 0.0
    %473 = vmatprep.subr.mxu0 0.0
    %474 = vmatpush1.msra.mxu0 0.0
    %475 = vmatprep.subr.mxu0 0.0
    %476 = vmatpush1.msra.mxu0 0.0
    %477 = vmatprep.subr.mxu0 0.0
    %478 = vmatpush1.msra.mxu0 0.0
    %479 = vmatprep.subr.mxu0 0.0
    %480 = vmatpush1.msra.mxu0 0.0
    %481 = vmatprep.subr.mxu0 0.0
    %482 = vmatpush1.msra.mxu0 0.0
    %483 = vmatprep.subr.mxu0 0.0
    %484 = vmatpush1.msra.mxu0 0.0
    %485 = vmatprep.subr.mxu0 0.0
    %486 = vmatpush1.msra.mxu0 0.0
    %487 = vmatprep.subr.mxu0 0.0
    %488 = vmatpush1.msra.mxu0 0.0
    %489 = vmatprep.subr.mxu0 0.0
    %490 = vmatpush1.msra.mxu0 0.0
    %491 = vmatprep.subr.mxu0 0.0
    %492 = vmatpush1.msra.mxu0 0.0
    %493 = vmatprep.subr.mxu0 0.0
    %494 = vmatpush1.msra.mxu0 0.0
    %495 = vmatprep.subr.mxu0 0.0
    %496 = vmatpush1.msra.mxu0 0.0
    %497 = vmatprep.subr.mxu0 0.0
    %498 = vmatpush1.msra.mxu0 0.0
    %499 = vmatprep.subr.mxu0 0.0
    %500 = vmatpush1.msra.mxu0 0.0
    %501 = vmatprep.subr.mxu0 0.0
    %502 = vmatpush1.msra.mxu0 0.0
    %503 = vmatprep.subr.mxu0 0.0
    %504 = vmatpush1.msra.mxu0 0.0
    %505 = vmatprep.subr.mxu0 0.0
    %506 = vmatpush1.msra.mxu0 0.0
    %507 = vmatprep.subr.mxu0 0.0
    %508 = vmatpush1.msra.mxu0 0.0
    %509 = vmatprep.subr.mxu0 0.0
    %510 = vmatpush1.msra.mxu0 0.0
    %511 = vmatprep.subr.mxu0 0.0
    %512 = vmatpush1.msra.mxu0 0.0
    %513 = vmatprep.subr.mxu0 0.0
    %514 = vmatpush1.msra.mxu0 0.0
    %515 = vmatprep.subr.mxu0 0.0
    %516 = vmatpush1.msra.mxu0 0.0
    %517 = vmatprep.mubr.f32.mxu0 0.0
    %518 = vmatmul.mubr.f32.gmra.mrb[0].mxu0 %v451
    %v519 = vpop.f32.mrb[0].mxu0
    %v520 = vadd.f32 0.0, %v519
    %v521 = vpop.f32.mrb[0].mxu0
    %522 = vdwg.mxu0
    %v524 = vrot.slane %v520, 4
    %v526 = vadd.f32 %v122, %v524
    %v527 = vxor.u32 %v526, 2147483648
    %v528 = vmul.f32 %v527, 1.442695
    %v529 = vpow.pop %v528
    %v530 = vadd.f32 %v529, 1.0
    %v531 = vrcp.pop %v530
    %v532 = vmul.f32 1.0, %v531
    %v533 = vtanh.pop %v526
    %v535 = vrot.slane %v441, 4
    %v537 = vmul.f32 %v532, %v535
    %539 = vrot.lane.b32.xlu0 %v533, 64
    %v540 = vpop.permute.xlu0 %539
    %v542 = vmul.f32 %v532, %v540
    %544 = vrot.lane.b32.xlu0 %v542, 32
    %v545 = vpop.permute.xlu0 %544
    %v547 = vadd.f32 %v537, %v545
    %v548 = vtanh.pop %v547
    %550 = vrot.lane.b32.xlu0 %v548, 64
    %v551 = vpop.permute.xlu0 %550
    %v553 = vmul.f32 %v532, %v551
    %v555 = vrot.slane %v553, 4
    %556 = vrot.lane.b32.xlu0 %v555, 32
    %v557 = vpop.permute.xlu0 %556
    %v558 = vsel %vm139, %v557, 0
    %560 = vmatprep.subr.mxu0 0.0
    %561 = vmatpush1.msra.mxu0 %v135
    %562 = vmatprep.subr.mxu0 0.0
    %563 = vmatpush1.msra.mxu0 %v136
    %564 = vmatprep.subr.mxu0 0.0
    %565 = vmatpush1.msra.mxu0 %v137
    %566 = vmatprep.subr.mxu0 0.0
    %567 = vmatpush1.msra.mxu0 %v138
    %568 = vmatprep.subr.mxu0 0.0
    %569 = vmatpush1.msra.mxu0 0.0
    %570 = vmatprep.subr.mxu0 0.0
    %571 = vmatpush1.msra.mxu0 0.0
    %572 = vmatprep.subr.mxu0 0.0
    %573 = vmatpush1.msra.mxu0 0.0
    %574 = vmatprep.subr.mxu0 0.0
    %575 = vmatpush1.msra.mxu0 0.0
    %576 = vmatprep.subr.mxu0 0.0
    %577 = vmatpush1.msra.mxu0 0.0
    %578 = vmatprep.subr.mxu0 0.0
    %579 = vmatpush1.msra.mxu0 0.0
    %580 = vmatprep.subr.mxu0 0.0
    %581 = vmatpush1.msra.mxu0 0.0
    %582 = vmatprep.subr.mxu0 0.0
    %583 = vmatpush1.msra.mxu0 0.0
    %584 = vmatprep.subr.mxu0 0.0
    %585 = vmatpush1.msra.mxu0 0.0
    %586 = vmatprep.subr.mxu0 0.0
    %587 = vmatpush1.msra.mxu0 0.0
    %588 = vmatprep.subr.mxu0 0.0
    %589 = vmatpush1.msra.mxu0 0.0
    %590 = vmatprep.subr.mxu0 0.0
    %591 = vmatpush1.msra.mxu0 0.0
    %592 = vmatprep.subr.mxu0 0.0
    %593 = vmatpush1.msra.mxu0 0.0
    %594 = vmatprep.subr.mxu0 0.0
    %595 = vmatpush1.msra.mxu0 0.0
    %596 = vmatprep.subr.mxu0 0.0
    %597 = vmatpush1.msra.mxu0 0.0
    %598 = vmatprep.subr.mxu0 0.0
    %599 = vmatpush1.msra.mxu0 0.0
    %600 = vmatprep.subr.mxu0 0.0
    %601 = vmatpush1.msra.mxu0 0.0
    %602 = vmatprep.subr.mxu0 0.0
    %603 = vmatpush1.msra.mxu0 0.0
    %604 = vmatprep.subr.mxu0 0.0
    %605 = vmatpush1.msra.mxu0 0.0
    %606 = vmatprep.subr.mxu0 0.0
    %607 = vmatpush1.msra.mxu0 0.0
    %608 = vmatprep.subr.mxu0 0.0
    %609 = vmatpush1.msra.mxu0 0.0
    %610 = vmatprep.subr.mxu0 0.0
    %611 = vmatpush1.msra.mxu0 0.0
    %612 = vmatprep.subr.mxu0 0.0
    %613 = vmatpush1.msra.mxu0 0.0
    %614 = vmatprep.subr.mxu0 0.0
    %615 = vmatpush1.msra.mxu0 0.0
    %616 = vmatprep.subr.mxu0 0.0
    %617 = vmatpush1.msra.mxu0 0.0
    %618 = vmatprep.subr.mxu0 0.0
    %619 = vmatpush1.msra.mxu0 0.0
    %620 = vmatprep.subr.mxu0 0.0
    %621 = vmatpush1.msra.mxu0 0.0
    %622 = vmatprep.subr.mxu0 0.0
    %623 = vmatpush1.msra.mxu0 0.0
    %624 = vmatprep.mubr.f32.mxu0 0.0
    %625 = vmatmul.mubr.f32.gmra.mrb[0].mxu0 %v558
    %v626 = vpop.f32.mrb[0].mxu0
    %v627 = vadd.f32 0.0, %v626
    %v628 = vpop.f32.mrb[0].mxu0
    %629 = vdwg.mxu0
    %v630 = vadd.f32 %v127, %v627
    %v631 = vxor.u32 %v630, 2147483648
    %v632 = vmul.f32 %v631, 1.442695
    %v633 = vpow.pop %v632
    %v634 = vadd.f32 %v633, 1.0
    %v635 = vrcp.pop %v634
    %v636 = vmul.f32 1.0, %v635
    %v637 = vtanh.pop %v630
    %v639 = vrot.slane %v547, 4
    %v641 = vmul.f32 %v636, %v639
    %643 = vrot.lane.b32.xlu0 %v637, 64
    %v644 = vpop.permute.xlu0 %643
    %v646 = vmul.f32 %v636, %v644
    %648 = vrot.lane.b32.xlu0 %v646, 32
    %v649 = vpop.permute.xlu0 %648
    %v651 = vadd.f32 %v641, %v649
    %v652 = vtanh.pop %v651
    %654 = vrot.lane.b32.xlu0 %v652, 64
    %v655 = vpop.permute.xlu0 %654
    %v657 = vmul.f32 %v636, %v655
    %659 = vrot.lane.b32.xlu0 %v657, 32
    %v660 = vpop.permute.xlu0 %659
    %v661 = vsel %vm139, %v660, 0
    %663 = vmatprep.subr.mxu0 0.0
    %664 = vmatpush1.msra.mxu0 %v135
    %665 = vmatprep.subr.mxu0 0.0
    %666 = vmatpush1.msra.mxu0 %v136
    %667 = vmatprep.subr.mxu0 0.0
    %668 = vmatpush1.msra.mxu0 %v137
    %669 = vmatprep.subr.mxu0 0.0
    %670 = vmatpush1.msra.mxu0 %v138
    %671 = vmatprep.subr.mxu0 0.0
    %672 = vmatpush1.msra.mxu0 0.0
    %673 = vmatprep.subr.mxu0 0.0
    %674 = vmatpush1.msra.mxu0 0.0
    %675 = vmatprep.subr.mxu0 0.0
    %676 = vmatpush1.msra.mxu0 0.0
    %677 = vmatprep.subr.mxu0 0.0
    %678 = vmatpush1.msra.mxu0 0.0
    %679 = vmatprep.subr.mxu0 0.0
    %680 = vmatpush1.msra.mxu0 0.0
    %681 = vmatprep.subr.mxu0 0.0
    %682 = vmatpush1.msra.mxu0 0.0
    %683 = vmatprep.subr.mxu0 0.0
    %684 = vmatpush1.msra.mxu0 0.0
    %685 = vmatprep.subr.mxu0 0.0
    %686 = vmatpush1.msra.mxu0 0.0
    %687 = vmatprep.subr.mxu0 0.0
    %688 = vmatpush1.msra.mxu0 0.0
    %689 = vmatprep.subr.mxu0 0.0
    %690 = vmatpush1.msra.mxu0 0.0
    %691 = vmatprep.subr.mxu0 0.0
    %692 = vmatpush1.msra.mxu0 0.0
    %693 = vmatprep.subr.mxu0 0.0
    %694 = vmatpush1.msra.mxu0 0.0
    %695 = vmatprep.subr.mxu0 0.0
    %696 = vmatpush1.msra.mxu0 0.0
    %697 = vmatprep.subr.mxu0 0.0
    %698 = vmatpush1.msra.mxu0 0.0
    %699 = vmatprep.subr.mxu0 0.0
    %700 = vmatpush1.msra.mxu0 0.0
    %701 = vmatprep.subr.mxu0 0.0
    %702 = vmatpush1.msra.mxu0 0.0
    %703 = vmatprep.subr.mxu0 0.0
    %704 = vmatpush1.msra.mxu0 0.0
    %705 = vmatprep.subr.mxu0 0.0
    %706 = vmatpush1.msra.mxu0 0.0
    %707 = vmatprep.subr.mxu0 0.0
    %708 = vmatpush1.msra.mxu0 0.0
    %709 = vmatprep.subr.mxu0 0.0
    %710 = vmatpush1.msra.mxu0 0.0
    %711 = vmatprep.subr.mxu0 0.0
    %712 = vmatpush1.msra.mxu0 0.0
    %713 = vmatprep.subr.mxu0 0.0
    %714 = vmatpush1.msra.mxu0 0.0
    %715 = vmatprep.subr.mxu0 0.0
    %716 = vmatpush1.msra.mxu0 0.0
    %717 = vmatprep.subr.mxu0 0.0
    %718 = vmatpush1.msra.mxu0 0.0
    %719 = vmatprep.subr.mxu0 0.0
    %720 = vmatpush1.msra.mxu0 0.0
    %721 = vmatprep.subr.mxu0 0.0
    %722 = vmatpush1.msra.mxu0 0.0
    %723 = vmatprep.subr.mxu0 0.0
    %724 = vmatpush1.msra.mxu0 0.0
    %725 = vmatprep.subr.mxu0 0.0
    %726 = vmatpush1.msra.mxu0 0.0
    %727 = vmatprep.mubr.f32.mxu0 0.0
    %728 = vmatmul.mubr.f32.gmra.mrb[0].mxu0 %v661
    %v729 = vpop.f32.mrb[0].mxu0
    %v730 = vadd.f32 0.0, %v729
    %v731 = vpop.f32.mrb[0].mxu0
    %732 = vdwg.mxu0
    %v734 = vrot.slane %v730, 4
    %v736 = vadd.f32 %v127, %v734
    %v737 = vxor.u32 %v736, 2147483648
    %v738 = vmul.f32 %v737, 1.442695
    %v739 = vpow.pop %v738
    %v740 = vadd.f32 %v739, 1.0
    %v741 = vrcp.pop %v740
    %v742 = vmul.f32 1.0, %v741
    %v743 = vtanh.pop %v736
    %v745 = vrot.slane %v651, 4
    %v747 = vmul.f32 %v742, %v745
    %749 = vrot.lane.b32.xlu0 %v743, 64
    %v750 = vpop.permute.xlu0 %749
    %v752 = vmul.f32 %v742, %v750
    %754 = vrot.lane.b32.xlu0 %v752, 32
    %v755 = vpop.permute.xlu0 %754
    %v757 = vadd.f32 %v747, %v755
    %v758 = vtanh.pop %v757
    %760 = vrot.lane.b32.xlu0 %v758, 64
    %v761 = vpop.permute.xlu0 %760
    %v763 = vmul.f32 %v742, %v761
    %v765 = vrot.slane %v763, 4
    %766 = vrot.lane.b32.xlu0 %v765, 32
    %v767 = vpop.permute.xlu0 %766
    %v768 = vsel %vm139, %v767, 0
    %770 = vmatprep.subr.mxu0 0.0
    %771 = vmatpush1.msra.mxu0 %v135
    %772 = vmatprep.subr.mxu0 0.0
    %773 = vmatpush1.msra.mxu0 %v136
    %774 = vmatprep.subr.mxu0 0.0
    %775 = vmatpush1.msra.mxu0 %v137
    %776 = vmatprep.subr.mxu0 0.0
    %777 = vmatpush1.msra.mxu0 %v138
    %778 = vmatprep.subr.mxu0 0.0
    %779 = vmatpush1.msra.mxu0 0.0
    %780 = vmatprep.subr.mxu0 0.0
    %781 = vmatpush1.msra.mxu0 0.0
    %782 = vmatprep.subr.mxu0 0.0
    %783 = vmatpush1.msra.mxu0 0.0
    %784 = vmatprep.subr.mxu0 0.0
    %785 = vmatpush1.msra.mxu0 0.0
    %786 = vmatprep.subr.mxu0 0.0
    %787 = vmatpush1.msra.mxu0 0.0
    %788 = vmatprep.subr.mxu0 0.0
    %789 = vmatpush1.msra.mxu0 0.0
    %790 = vmatprep.subr.mxu0 0.0
    %791 = vmatpush1.msra.mxu0 0.0
    %792 = vmatprep.subr.mxu0 0.0
    %793 = vmatpush1.msra.mxu0 0.0
    %794 = vmatprep.subr.mxu0 0.0
    %795 = vmatpush1.msra.mxu0 0.0
    %796 = vmatprep.subr.mxu0 0.0
    %797 = vmatpush1.msra.mxu0 0.0
    %798 = vmatprep.subr.mxu0 0.0
    %799 = vmatpush1.msra.mxu0 0.0
    %800 = vmatprep.subr.mxu0 0.0
    %801 = vmatpush1.msra.mxu0 0.0
    %802 = vmatprep.subr.mxu0 0.0
    %803 = vmatpush1.msra.mxu0 0.0
    %804 = vmatprep.subr.mxu0 0.0
    %805 = vmatpush1.msra.mxu0 0.0
    %806 = vmatprep.subr.mxu0 0.0
    %807 = vmatpush1.msra.mxu0 0.0
    %808 = vmatprep.subr.mxu0 0.0
    %809 = vmatpush1.msra.mxu0 0.0
    %810 = vmatprep.subr.mxu0 0.0
    %811 = vmatpush1.msra.mxu0 0.0
    %812 = vmatprep.subr.mxu0 0.0
    %813 = vmatpush1.msra.mxu0 0.0
    %814 = vmatprep.subr.mxu0 0.0
    %815 = vmatpush1.msra.mxu0 0.0
    %816 = vmatprep.subr.mxu0 0.0
    %817 = vmatpush1.msra.mxu0 0.0
    %818 = vmatprep.subr.mxu0 0.0
    %819 = vmatpush1.msra.mxu0 0.0
    %820 = vmatprep.subr.mxu0 0.0
    %821 = vmatpush1.msra.mxu0 0.0
    %822 = vmatprep.subr.mxu0 0.0
    %823 = vmatpush1.msra.mxu0 0.0
    %824 = vmatprep.subr.mxu0 0.0
    %825 = vmatpush1.msra.mxu0 0.0
    %826 = vmatprep.subr.mxu0 0.0
    %827 = vmatpush1.msra.mxu0 0.0
    %828 = vmatprep.subr.mxu0 0.0
    %829 = vmatpush1.msra.mxu0 0.0
    %830 = vmatprep.subr.mxu0 0.0
    %831 = vmatpush1.msra.mxu0 0.0
    %832 = vmatprep.subr.mxu0 0.0
    %833 = vmatpush1.msra.mxu0 0.0
    %834 = vmatprep.mubr.f32.mxu0 0.0
    %835 = vmatmul.mubr.f32.gmra.mrb[0].mxu0 %v768
    %v836 = vpop.f32.mrb[0].mxu0
    %v837 = vadd.f32 0.0, %v836
    %v838 = vpop.f32.mrb[0].mxu0
    %839 = vdwg.mxu0
    %v840 = vadd.f32 %v132, %v837
    %v841 = vxor.u32 %v840, 2147483648
    %v842 = vmul.f32 %v841, 1.442695
    %v843 = vpow.pop %v842
    %v844 = vadd.f32 %v843, 1.0
    %v845 = vrcp.pop %v844
    %v846 = vmul.f32 1.0, %v845
    %v847 = vtanh.pop %v840
    %v849 = vrot.slane %v757, 4
    %v851 = vmul.f32 %v846, %v849
    %853 = vrot.lane.b32.xlu0 %v847, 64
    %v854 = vpop.permute.xlu0 %853
    %v856 = vmul.f32 %v846, %v854
    %858 = vrot.lane.b32.xlu0 %v856, 32
    %v859 = vpop.permute.xlu0 %858
    %v861 = vadd.f32 %v851, %v859
    %v862 = vtanh.pop %v861
    %864 = vrot.lane.b32.xlu0 %v862, 64
    %v865 = vpop.permute.xlu0 %864
    %v867 = vmul.f32 %v846, %v865
    %869 = vrot.lane.b32.xlu0 %v867, 32
    %v870 = vpop.permute.xlu0 %869
    %v871 = vsel %vm139, %v870, 0
    %873 = vmatprep.subr.mxu0 0.0
    %874 = vmatpush1.msra.mxu0 %v135
    %875 = vmatprep.subr.mxu0 0.0
    %876 = vmatpush1.msra.mxu0 %v136
    %877 = vmatprep.subr.mxu0 0.0
    %878 = vmatpush1.msra.mxu0 %v137
    %879 = vmatprep.subr.mxu0 0.0
    %880 = vmatpush1.msra.mxu0 %v138
    %881 = vmatprep.subr.mxu0 0.0
    %882 = vmatpush1.msra.mxu0 0.0
    %883 = vmatprep.subr.mxu0 0.0
    %884 = vmatpush1.msra.mxu0 0.0
    %885 = vmatprep.subr.mxu0 0.0
    %886 = vmatpush1.msra.mxu0 0.0
    %887 = vmatprep.subr.mxu0 0.0
    %888 = vmatpush1.msra.mxu0 0.0
    %889 = vmatprep.subr.mxu0 0.0
    %890 = vmatpush1.msra.mxu0 0.0
    %891 = vmatprep.subr.mxu0 0.0
    %892 = vmatpush1.msra.mxu0 0.0
    %893 = vmatprep.subr.mxu0 0.0
    %894 = vmatpush1.msra.mxu0 0.0
    %895 = vmatprep.subr.mxu0 0.0
    %896 = vmatpush1.msra.mxu0 0.0
    %897 = vmatprep.subr.mxu0 0.0
    %898 = vmatpush1.msra.mxu0 0.0
    %899 = vmatprep.subr.mxu0 0.0
    %900 = vmatpush1.msra.mxu0 0.0
    %901 = vmatprep.subr.mxu0 0.0
    %902 = vmatpush1.msra.mxu0 0.0
    %903 = vmatprep.subr.mxu0 0.0
    %904 = vmatpush1.msra.mxu0 0.0
    %905 = vmatprep.subr.mxu0 0.0
    %906 = vmatpush1.msra.mxu0 0.0
    %907 = vmatprep.subr.mxu0 0.0
    %908 = vmatpush1.msra.mxu0 0.0
    %909 = vmatprep.subr.mxu0 0.0
    %910 = vmatpush1.msra.mxu0 0.0
    %911 = vmatprep.subr.mxu0 0.0
    %912 = vmatpush1.msra.mxu0 0.0
    %913 = vmatprep.subr.mxu0 0.0
    %914 = vmatpush1.msra.mxu0 0.0
    %915 = vmatprep.subr.mxu0 0.0
    %916 = vmatpush1.msra.mxu0 0.0
    %917 = vmatprep.subr.mxu0 0.0
    %918 = vmatpush1.msra.mxu0 0.0
    %919 = vmatprep.subr.mxu0 0.0
    %920 = vmatpush1.msra.mxu0 0.0
    %921 = vmatprep.subr.mxu0 0.0
    %922 = vmatpush1.msra.mxu0 0.0
    %923 = vmatprep.subr.mxu0 0.0
    %924 = vmatpush1.msra.mxu0 0.0
    %925 = vmatprep.subr.mxu0 0.0
    %926 = vmatpush1.msra.mxu0 0.0
    %927 = vmatprep.subr.mxu0 0.0
    %928 = vmatpush1.msra.mxu0 0.0
    %929 = vmatprep.subr.mxu0 0.0
    %930 = vmatpush1.msra.mxu0 0.0
    %931 = vmatprep.subr.mxu0 0.0
    %932 = vmatpush1.msra.mxu0 0.0
    %933 = vmatprep.subr.mxu0 0.0
    %934 = vmatpush1.msra.mxu0 0.0
    %935 = vmatprep.subr.mxu0 0.0
    %936 = vmatpush1.msra.mxu0 0.0
    %937 = vmatprep.mubr.f32.mxu0 0.0
    %938 = vmatmul.mubr.f32.gmra.mrb[0].mxu0 %v871
    %v939 = vpop.f32.mrb[0].mxu0
    %v940 = vadd.f32 0.0, %v939
    %v941 = vpop.f32.mrb[0].mxu0
    %942 = vdwg.mxu0
    %v944 = vrot.slane %v940, 4
    %v946 = vadd.f32 %v132, %v944
    %v947 = vxor.u32 %v946, 2147483648
    %v948 = vmul.f32 %v947, 1.442695
    %v949 = vpow.pop %v948
    %v950 = vadd.f32 %v949, 1.0
    %v951 = vrcp.pop %v950
    %v952 = vmul.f32 1.0, %v951
    %v953 = vtanh.pop %v946
    %v955 = vrot.slane %v861, 4
    %v957 = vmul.f32 %v952, %v955
    %959 = vrot.lane.b32.xlu0 %v953, 64
    %v960 = vpop.permute.xlu0 %959
    %v962 = vmul.f32 %v952, %v960
    %964 = vrot.lane.b32.xlu0 %v962, 32
    %v965 = vpop.permute.xlu0 %964
    %v967 = vadd.f32 %v957, %v965
    %v968 = vtanh.pop %v967
    %970 = vrot.lane.b32.xlu0 %v968, 64
    %v971 = vpop.permute.xlu0 %970
    %v973 = vmul.f32 %v952, %v971
    %v974 = vld [vmem:[%s4] sm:$0xff]
    %v975 = vld [vmem:[%s4 + $0x8] sm:$0xff]
    %v976 = vld [vmem:[%s4 + $0x10] sm:$0xff]
    %v977 = vld [vmem:[%s4 + $0x18] sm:$0xff]
    %v978 = vld [vmem:[%s5] sm:$0x1]
    %v980 = vlaneseq
    %v981 = vshrl.u32 %v980, 7
    %v982 = vsub.s32 0, %v981
    %v983 = vrot.slane %v978, %v982
    %v986 = vrot.slane %v973, 4
    %987 = vrot.lane.b32.xlu0 %v986, 32
    %v988 = vpop.permute.xlu0 %987
    %v989 = vsel %vm139, %v988, 0
    %991 = vmatprep.subr.mxu0 0.0
    %992 = vmatpush1.msra.mxu0 %v974
    %993 = vmatprep.subr.mxu0 0.0
    %994 = vmatpush1.msra.mxu0 %v975
    %995 = vmatprep.subr.mxu0 0.0
    %996 = vmatpush1.msra.mxu0 %v976
    %997 = vmatprep.subr.mxu0 0.0
    %998 = vmatpush1.msra.mxu0 %v977
    %999 = vmatprep.subr.mxu0 0.0
    %1000 = vmatpush1.msra.mxu0 0.0
    %1001 = vmatprep.subr.mxu0 0.0
    %1002 = vmatpush1.msra.mxu0 0.0
    %1003 = vmatprep.subr.mxu0 0.0
    %1004 = vmatpush1.msra.mxu0 0.0
    %1005 = vmatprep.subr.mxu0 0.0
    %1006 = vmatpush1.msra.mxu0 0.0
    %1007 = vmatprep.subr.mxu0 0.0
    %1008 = vmatpush1.msra.mxu0 0.0
    %1009 = vmatprep.subr.mxu0 0.0
    %1010 = vmatpush1.msra.mxu0 0.0
    %1011 = vmatprep.subr.mxu0 0.0
    %1012 = vmatpush1.msra.mxu0 0.0
    %1013 = vmatprep.subr.mxu0 0.0
    %1014 = vmatpush1.msra.mxu0 0.0
    %1015 = vmatprep.subr.mxu0 0.0
    %1016 = vmatpush1.msra.mxu0 0.0
    %1017 = vmatprep.subr.mxu0 0.0
    %1018 = vmatpush1.msra.mxu0 0.0
    %1019 = vmatprep.subr.mxu0 0.0
    %1020 = vmatpush1.msra.mxu0 0.0
    %1021 = vmatprep.subr.mxu0 0.0
    %1022 = vmatpush1.msra.mxu0 0.0
    %1023 = vmatprep.subr.mxu0 0.0
    %1024 = vmatpush1.msra.mxu0 0.0
    %1025 = vmatprep.subr.mxu0 0.0
    %1026 = vmatpush1.msra.mxu0 0.0
    %1027 = vmatprep.subr.mxu0 0.0
    %1028 = vmatpush1.msra.mxu0 0.0
    %1029 = vmatprep.subr.mxu0 0.0
    %1030 = vmatpush1.msra.mxu0 0.0
    %1031 = vmatprep.subr.mxu0 0.0
    %1032 = vmatpush1.msra.mxu0 0.0
    %1033 = vmatprep.subr.mxu0 0.0
    %1034 = vmatpush1.msra.mxu0 0.0
    %1035 = vmatprep.subr.mxu0 0.0
    %1036 = vmatpush1.msra.mxu0 0.0
    %1037 = vmatprep.subr.mxu0 0.0
    %1038 = vmatpush1.msra.mxu0 0.0
    %1039 = vmatprep.subr.mxu0 0.0
    %1040 = vmatpush1.msra.mxu0 0.0
    %1041 = vmatprep.subr.mxu0 0.0
    %1042 = vmatpush1.msra.mxu0 0.0
    %1043 = vmatprep.subr.mxu0 0.0
    %1044 = vmatpush1.msra.mxu0 0.0
    %1045 = vmatprep.subr.mxu0 0.0
    %1046 = vmatpush1.msra.mxu0 0.0
    %1047 = vmatprep.subr.mxu0 0.0
    %1048 = vmatpush1.msra.mxu0 0.0
    %1049 = vmatprep.subr.mxu0 0.0
    %1050 = vmatpush1.msra.mxu0 0.0
    %1051 = vmatprep.subr.mxu0 0.0
    %1052 = vmatpush1.msra.mxu0 0.0
    %1053 = vmatprep.subr.mxu0 0.0
    %1054 = vmatpush1.msra.mxu0 0.0
    %1055 = vmatprep.mubr.f32.mxu0 0.0
    %1056 = vmatmul.mubr.f32.gmra.mrb[0].mxu0 %v989
    %v1057 = vpop.f32.mrb[0].mxu0
    %v1058 = vadd.f32 %v983, %v1057
    %v1059 = vpop.f32.mrb[0].mxu0
    %1060 = vdwg.mxu0
    %vm1061 = vcmask 125952
    %1062 = vst.msk [vmem:[#allocation2] sm:$0xf] %vm1061, %v1058
    // Predicated region
    $region26: #{tpu_custom_call.1} parent=1 // pred_check
      _
    $region27: #{tpu_custom_call.1} parent=1 // pred_check_branch
      %1064 = sbr.rel (0) target = $region29
    $region28: #{tpu_custom_call.1} parent=1 // pred_region
      %s1066 = ssub.s32 64, 64
      %1067 = vsyncadd [#allocation3], %s1066
      %s1069 = sshll.u32 [#allocation2], 4
      %s1070 = int_to_ptr.vmem [resolvable:$true] %s1069
      %1072 = dma.vmem_to_hbm [thread:$0]  %s1070, 64, %s6, [#allocation3]
    $region29: #{tpu_custom_call.1} parent=1 // pred_fallthru
      _
    // Predicated region
    $region30: #{tpu_custom_call.1} parent=1 // pred_check
      _
    $region31: #{tpu_custom_call.1} parent=1 // pred_check_branch
      %1074 = sbr.rel (0) target = $region33
    $region32: #{tpu_custom_call.1} parent=1 // pred_region
      %1075 = dma.done [#allocation3], 64
    $region33: #{tpu_custom_call.1} parent=1 // pred_fallthru
      _
    %1076 = vsyncpa [#allocation3], 1

</llo_original>
